<compile_context>
chip_gen: v7x
topology: tpu7x:2x2x1
jax: 0.10.0
libtpu: 0.0.40
codegen_flags: <defaults>
</compile_context>

<pallas_src>
import math

import jax
import jax.numpy as jnp
from jax.experimental import pallas as pl
from jax.experimental.pallas import tpu as pltpu

# vreg sublane rows for a given itemsize (sub-32-bit dtypes pack along sublanes)
_SUBLANES = {4: 8, 2: 16, 1: 32}


def make_positional_encoding_table(emb: int, max_len: int = 3000,
                                   dtype=jnp.float32) -> jax.Array:
    """Buffer built in PositionalEncoding.__init__, shape (max_len, emb).

    Build it directly in the activation dtype to avoid a per-forward cast.
    """
    if emb % 2 != 0:
        # Same latent restriction as the original PyTorch code (pe[:, 1::2]
        # shape-mismatches for odd emb); make it an explicit error.
        raise ValueError(f"emb must be even, got {emb}")
    position = jnp.arange(0, max_len, dtype=jnp.float32)[:, None]            # (max_len, 1)
    div_term = jnp.exp(jnp.arange(0, emb, 2, dtype=jnp.float32)
                       * (-math.log(10000.0) / emb))                         # (emb//2,)
    angles = position * div_term                                             # (max_len, emb//2)
    pe = jnp.zeros((max_len, emb), dtype=jnp.float32)
    pe = pe.at[:, 0::2].set(jnp.sin(angles))
    pe = pe.at[:, 1::2].set(jnp.cos(angles))
    return pe.astype(dtype)


def _vmem_budget_bytes():
    """(working-set budget, vmem_limit_bytes), generation aware.

    v5e/v6e have 128 MiB physical VMEM -> bigger tiles amortize the ~0.35 us
    per-grid-step overhead; v7x has 64 MiB -> stay conservative and leave
    headroom for Mosaic internal scratch.
    """
    cap = None
    try:
        info_fn = getattr(pltpu, "get_tpu_info", None)
        if info_fn is not None:
            cap = getattr(info_fn(), "vmem_capacity_bytes", None)
    except Exception:
        cap = None
    if cap is not None and cap > 96 * 1024 * 1024:        # v5e / v6e (128 MiB)
        return 48 * 1024 * 1024, 64 * 1024 * 1024
    return 40 * 1024 * 1024, 48 * 1024 * 1024             # v7x (64 MiB) / unknown


def _pick_tiles(bs: int, R: int, L: int, itemsize: int, sub: int,
                budget_bytes: int):
    """Choose block dims (tb, tr, tl) for x:(bs, R, L) and pe:(R, L).

    tl: lane axis -- multiple of 128 dividing L (or full L when L % 128 != 0).
    tr: sublane axis -- multiple of `sub` dividing R (or full R).
    tb: leading batch axis -- any divisor of bs (no (8,128) constraint).
    The footprint counts double-buffered x + out blocks plus the
    double-buffered pe block. Preference order: >= 2 steps on the parallel
    (R, L) grid axes, then an even (or >= 8) step count (v7x megacore
    balance), then the largest block that fits the budget.
    """
    if L % 128 == 0:
        lane_cands = sorted((d for d in range(128, L + 1, 128) if L % d == 0),
                            reverse=True)
    else:
        lane_cands = [L]                       # full extent is always legal
    r_cands = sorted((d for d in range(sub, R + 1, sub) if R % d == 0),
                     reverse=True)
    if R not in r_cands:
        r_cands.append(R)                      # full extent is always legal
        r_cands.sort(reverse=True)
    b_cands = [d for d in range(1, bs + 1) if bs % d == 0]

    def footprint(tb, tr, tl):
        # 2x double-buffered (x + out) blocks + double-buffered pe block.
        return (4 * tb + 2) * tr * tl * itemsize

    best_score, best = None, None
    for tl in lane_cands:
        for tr in r_cands:
            if footprint(1, tr, tl) > budget_bytes:
                continue
            tb = max(d for d in b_cands if footprint(d, tr, tl) <= budget_bytes)
            n_par = (R // tr) * (L // tl)      # steps on the parallel axes
            score = (
                1 if n_par >= 2 else 0,
                1 if (n_par % 2 == 0 or n_par >= 8) else 0,
                tb * tr * tl,
            )
            if best_score is None or score > best_score:
                best_score, best = score, (tb, tr, tl)

    if best is None:
        # Even the minimal block exceeds the budget (pathological shapes);
        # fall back to the smallest legal block and rely on the vmem limit.
        return 1, min(r_cands), min(lane_cands)
    return best


def _pos_add_kernel(x_ref, pe_ref, o_ref):
    # x_ref / o_ref: (tb, tr, tl); pe_ref: (tr, tl).
    # Broadcast over the leading batch dim is a cheap vreg reuse; the add is a
    # single lane/sublane-dense VPU op per vreg.
    o_ref[...] = x_ref[...] + pe_ref[...]


def _broadcast_add(x3: jax.Array, pe2: jax.Array, *, budget_bytes: int,
                   vmem_limit_bytes: int, alias_input: bool) -> jax.Array:
    """out[b, r, l] = x3[b, r, l] + pe2[r, l], tiled & pipelined."""
    bs, R, L = x3.shape
    itemsize = jnp.dtype(x3.dtype).itemsize
    sub = _SUBLANES.get(itemsize, 8)
    tb, tr, tl = _pick_tiles(bs, R, L, itemsize, sub, budget_bytes)
    grid = (R // tr, L // tl, bs // tb)        # batch innermost: pe tile stays resident

    extra = {}
    if alias_input:
        extra["input_output_aliases"] = {0: 0}

    return pl.pallas_call(
        _pos_add_kernel,
        out_shape=jax.ShapeDtypeStruct((bs, R, L), x3.dtype),
        grid=grid,
        in_specs=[
            pl.BlockSpec((tb, tr, tl), lambda i, j, b: (b, i, j)),   # x
            pl.BlockSpec((tr, tl), lambda i, j, b: (i, j)),          # pe (batch-independent)
        ],
        out_specs=pl.BlockSpec((tb, tr, tl), lambda i, j, b: (b, i, j)),
        compiler_params=pltpu.CompilerParams(
            dimension_semantics=("parallel", "parallel", "arbitrary"),
            vmem_limit_bytes=vmem_limit_bytes,
        ),
        **extra,
    )(x3, pe2)


def positional_encoding(x: jax.Array, pe: jax.Array, *,
                        donate_x: bool = False) -> jax.Array:
    """forward(x): x + pe[:n, :] broadcast over batch; x of shape (bs, n, emb)."""
    bs, n, emb = x.shape
    max_len, pe_emb = pe.shape
    assert pe_emb == emb, f"pe emb {pe_emb} != x emb {emb}"
    assert n <= max_len, f"sequence length {n} exceeds pe max_len {max_len}"

    budget_bytes, vmem_limit_bytes = _vmem_budget_bytes()
    itemsize = jnp.dtype(x.dtype).itemsize
    sub = _SUBLANES.get(itemsize, 8)

    pe_n = pe[:n, :]
    if pe_n.dtype != x.dtype:
        # Note: casting pe to bf16 before the add rounds pe prior to the sum
        # (PyTorch adds an f32 buffer). Build the table in the activation
        # dtype (see make_positional_encoding_table) to skip this convert.
        pe_n = pe_n.astype(x.dtype)

    if emb % 128 == 0:
        # Natural (bs, n, emb) layout: seq tiles on the sublane axis, emb on
        # the lane axis -> full vreg occupancy for any batch size, zero-copy.
        return _broadcast_add(x, pe_n, budget_bytes=budget_bytes,
                              vmem_limit_bytes=vmem_limit_bytes,
                              alias_input=donate_x)

    # Flattened lane-dense layout: split each (n*emb) row into (sub, L) so all
    # sublanes carry data even when bs < 8 (the reshape is a free row-major
    # re-split; x and pe flatten consistently so the per-position add matches).
    C = n * emb
    if C % sub == 0:
        R, L = sub, C // sub
    else:
        # TODO(synk): n*emb not divisible by the sublane count (needs odd/tiny
        # shapes the original module effectively forbids); correct but
        # sublane-sparse fallback.
        R, L = 1, C
    x3 = x.reshape(bs, R, L)
    pe2 = pe_n.reshape(R, L)

    L_orig = L
    if L % 128 != 0 and (4 + 2) * R * L * itemsize > budget_bytes:
        # A single full-extent lane block would bust VMEM: zero-pad lanes to a
        # multiple of 128 so the column axis can be tiled and double-buffered,
        # then slice the output back.
        Lp = -(-L // 128) * 128
        x3 = jnp.pad(x3, ((0, 0), (0, 0), (0, Lp - L)))
        pe2 = jnp.pad(pe2, ((0, 0), (0, Lp - L)))
        L = Lp

    out3 = _broadcast_add(x3, pe2, budget_bytes=budget_bytes,
                          vmem_limit_bytes=vmem_limit_bytes,
                          alias_input=donate_x)
    if L != L_orig:
        out3 = out3[:, :, :L_orig]
    return out3.reshape(bs, n, emb)


if __name__ == "__main__":
    key = jax.random.PRNGKey(0)
    k1, k2 = jax.random.split(key)

    # Case 1: emb not a multiple of 128 -> flattened sublane-dense path.
    bs, n, emb = 2, 8, 32
    pe_tbl = make_positional_encoding_table(emb, max_len=3000, dtype=jnp.float32)
    x = jax.random.normal(k1, (bs, n, emb), dtype=jnp.float32)
    out = jax.block_until_ready(positional_encoding(x, pe_tbl))
    ref = x + pe_tbl[None, :n, :]
    assert out.shape == (bs, n, emb)
    assert jnp.allclose(out, ref, atol=1e-6, rtol=1e-6)

    # Case 2: emb multiple of 128 -> natural (batch, seq, emb) path.
    bs2, n2, emb2 = 2, 16, 128
    pe_tbl2 = make_positional_encoding_table(emb2, max_len=3000, dtype=jnp.float32)
    x2 = jax.random.normal(k2, (bs2, n2, emb2), dtype=jnp.float32)
    out2 = jax.block_until_ready(positional_encoding(x2, pe_tbl2))
    ref2 = x2 + pe_tbl2[None, :n2, :]
    assert out2.shape == (bs2, n2, emb2)
    assert jnp.allclose(out2, ref2, atol=1e-6, rtol=1e-6)

    print("KERNEL_OK")
</pallas_src>

<mosaic_0001>
module attributes {stable_mosaic.version = 11 : i64} {
  func.func @_pos_add_kernel(%arg0: i32, %arg1: i32, %arg2: i32, %arg3: memref<2x8x32xf32, #tpu.memory_space<vmem>>, %arg4: memref<8x32xf32, #tpu.memory_space<vmem>>, %arg5: memref<2x8x32xf32, #tpu.memory_space<vmem>>) attributes {dimension_semantics = [#tpu.dimension_semantics<parallel>, #tpu.dimension_semantics<parallel>, #tpu.dimension_semantics<arbitrary>], iteration_bounds = array<i64: 1, 1, 1>, scalar_prefetch = 0 : i64, scratch_operands = 0 : i64, tpu.core_type = #tpu.core_type<tc>, window_params = [{transform_indices = @transform_0, window_bounds = array<i64: 2, 8, 32>}, {transform_indices = @transform_1, window_bounds = array<i64: 8, 32>}, {transform_indices = @transform_2, window_bounds = array<i64: 2, 8, 32>}]} {
    %c0 = arith.constant 0 : index
    %c0_0 = arith.constant 0 : index
    %c0_1 = arith.constant 0 : index
    %0 = vector.load %arg3[%c0, %c0_0, %c0_1] : memref<2x8x32xf32, #tpu.memory_space<vmem>>, vector<2x8x32xf32>
    %c0_2 = arith.constant 0 : index
    %c0_3 = arith.constant 0 : index
    %1 = vector.load %arg4[%c0_2, %c0_3] : memref<8x32xf32, #tpu.memory_space<vmem>>, vector<8x32xf32>
    %2 = vector.shape_cast %1 : vector<8x32xf32> to vector<1x8x32xf32>
    %3 = vector.broadcast %2 : vector<1x8x32xf32> to vector<2x8x32xf32>
    %4 = arith.addf %0, %3 : vector<2x8x32xf32>
    %c0_4 = arith.constant 0 : index
    %c0_5 = arith.constant 0 : index
    %c0_6 = arith.constant 0 : index
    %5 = vector.load %arg5[%c0_4, %c0_5, %c0_6] : memref<2x8x32xf32, #tpu.memory_space<vmem>>, vector<2x8x32xf32>
    tpu.vector_store %arg5[%c0_4, %c0_5, %c0_6], %4 {strides = array<i32>} : memref<2x8x32xf32, #tpu.memory_space<vmem>>, vector<2x8x32xf32>,
    return
  }
  func.func @transform_0(%arg0: i32, %arg1: i32, %arg2: i32) -> (i32, i32, i32) {
    %c0_i32 = arith.constant 0 : i32
    return %arg2, %arg0, %arg1 : i32, i32, i32
  }
  func.func @transform_1(%arg0: i32, %arg1: i32, %arg2: i32) -> (i32, i32) {
    %c0_i32 = arith.constant 0 : i32
    return %arg0, %arg1 : i32, i32
  }
  func.func @transform_2(%arg0: i32, %arg1: i32, %arg2: i32) -> (i32, i32, i32) {
    %c0_i32 = arith.constant 0 : i32
    return %arg2, %arg0, %arg1 : i32, i32, i32
  }
}

</mosaic_0001>

<llo_original>
// kernel: tpu_custom_call.1
$region0: #{tpu_custom_call.1}
  #allocation0 [shape = 'u32[]', space=smem, size = 0x4, offset = 0x4, fixed_abs, tag = 'smem constant byte address 0x4 - core index']
  #allocation1 [shape = 'u32[144,128]{1,0:T(1,128)}', space=vmem, size = 0x12000, scoped, tag = 'internal scratch']
  %s0 = inlined_call_operand.hbm [shape: f32[2,8,32], index: 0, kind: input, shape index: {}]
  %s1 = inlined_call_operand.hbm [shape: f32[8,32], index: 1, kind: input, shape index: {}]
  %s2 = inlined_call_operand.hbm [shape: f32[2,8,32], index: 2, kind: output, shape index: {}]
  %s3 = sld [smem:[#allocation0]]
  $region26: #{tpu_custom_call.1} parent=0
    _
  %s5 = ssub.s32 1, %s3
  %s6 = scalar_select 0, %s5, %s3
  $region1: #{tpu_custom_call.1} parent=0
    #allocation2 [shape = 'u8[8192]{0}', space=vmem, size = 0x2000, scoped, tag = 'input window, operand 0, single buffered']
    #allocation3 [shape = 's32[1]{0}', space=sflag, size = 0x4, scoped, tag = 'scoped memory for tpu_custom_call.1']
    #allocation4 [shape = 's32[1]{0}', space=sflag, size = 0x4, scoped, tag = 'scoped memory for tpu_custom_call.1']
    #allocation5 [shape = 'u8[4096]{0}', space=vmem, size = 0x1000, scoped, tag = 'input window, operand 1, single buffered']
    #allocation6 [shape = 's32[1]{0}', space=sflag, size = 0x4, scoped, tag = 'scoped memory for tpu_custom_call.1']
    #allocation7 [shape = 'u8[8192]{0}', space=vmem, size = 0x2000, scoped, tag = 'output window, operand 0, single buffered']
    %7 = vsyncpa [#allocation3], 0
    %8 = vsyncpa [#allocation6], 0
    %9 = vsyncpa [#allocation4], 0
    // Predicated region
    $region2: #{tpu_custom_call.1} parent=1 // pred_check
      _
    $region3: #{tpu_custom_call.1} parent=1 // pred_check_branch
      %11 = sbr.rel (0) target = $region5
    $region4: #{tpu_custom_call.1} parent=1 // pred_region
      %s13 = ssub.s32 256, 256
      %14 = vsyncadd [#allocation3], %s13
      %s15 = sshll.u32 [#allocation2], 4
      %s16 = int_to_ptr.vmem [resolvable:$true] %s15
      %21 = dma.hbm_to_vmem [thread:$0]  %s0, 256, %s16, [#allocation3], 128, 128, 8
    $region5: #{tpu_custom_call.1} parent=1 // pred_fallthru
      _
    // Predicated region
    $region6: #{tpu_custom_call.1} parent=1 // pred_check
      _
    $region7: #{tpu_custom_call.1} parent=1 // pred_check_branch
      %23 = sbr.rel (0) target = $region9
    $region8: #{tpu_custom_call.1} parent=1 // pred_region
      %s25 = ssub.s32 128, 128
      %26 = vsyncadd [#allocation6], %s25
      %s28 = sshll.u32 [#allocation5], 4
      %s29 = int_to_ptr.vmem [resolvable:$true] %s28
      %31 = dma.hbm_to_vmem [thread:$0]  %s1, 128, %s29, [#allocation6]
    $region9: #{tpu_custom_call.1} parent=1 // pred_fallthru
      _
    // Predicated region
    $region10: #{tpu_custom_call.1} parent=1 // pred_check
      _
    $region11: #{tpu_custom_call.1} parent=1 // pred_check_branch
      %33 = sbr.rel (0) target = $region13
    $region12: #{tpu_custom_call.1} parent=1 // pred_region
      %34 = dma.done [#allocation3], 256
    $region13: #{tpu_custom_call.1} parent=1 // pred_fallthru
      _
    // Predicated region
    $region14: #{tpu_custom_call.1} parent=1 // pred_check
      _
    $region15: #{tpu_custom_call.1} parent=1 // pred_check_branch
      %36 = sbr.rel (0) target = $region17
    $region16: #{tpu_custom_call.1} parent=1 // pred_region
      %37 = dma.done [#allocation6], 128
    $region17: #{tpu_custom_call.1} parent=1 // pred_fallthru
      _
    %v38 = vld [vmem:[#allocation2] sm:$0xff]
    %v39 = vld [vmem:[#allocation2 + $0x8] sm:$0xff]
    %v40 = vld [vmem:[#allocation5] sm:$0xff]
    %v41 = vadd.f32 %v38, %v40
    %v42 = vadd.f32 %v39, %v40
    %vm43 = vcmask 261120
    %44 = vst.msk [vmem:[#allocation7] sm:$0xff] %vm43, %v41
    %45 = vst.msk [vmem:[#allocation7 + $0x8] sm:$0xff] %vm43, %v42
    // Predicated region
    $region18: #{tpu_custom_call.1} parent=1 // pred_check
      _
    $region19: #{tpu_custom_call.1} parent=1 // pred_check_branch
      %47 = sbr.rel (0) target = $region21
    $region20: #{tpu_custom_call.1} parent=1 // pred_region
      %s49 = ssub.s32 256, 256
      %50 = vsyncadd [#allocation4], %s49
      %s51 = sshll.u32 [#allocation7], 4
      %s52 = int_to_ptr.vmem [resolvable:$true] %s51
      %57 = dma.vmem_to_hbm [thread:$0]  %s52, 256, %s2, [#allocation4], 128, 128, 8
    $region21: #{tpu_custom_call.1} parent=1 // pred_fallthru
      _
    // Predicated region
    $region22: #{tpu_custom_call.1} parent=1 // pred_check
      _
    $region23: #{tpu_custom_call.1} parent=1 // pred_check_branch
      %59 = sbr.rel (0) target = $region25
    $region24: #{tpu_custom_call.1} parent=1 // pred_region
      %60 = dma.done [#allocation4], 256
    $region25: #{tpu_custom_call.1} parent=1 // pred_fallthru
      _
    %61 = vsyncpa [#allocation3], 1
    %62 = vsyncpa [#allocation6], 1
    %63 = vsyncpa [#allocation4], 1

</llo_original>
